<compile_context>
chip_gen: v7x
topology: tpu7x:2x2x1
jax: 0.10.0
libtpu: 0.0.40
codegen_flags: <defaults>
</compile_context>

<pallas_src>
import math

import numpy as np
import jax
import jax.numpy as jnp
from jax.experimental import pallas as pl
from jax.experimental.pallas import tpu as pltpu


# ----------------------------- Pallas kernel -----------------------------

def _embedding_kernel(x_ref, cls_ref, pos_ref, o_ref):
    # x_ref   : (1, Np,   D)  current batch element
    # cls_ref : (1, 1,    D)  shared cls token (resident via constant index_map)
    # pos_ref : (1, Np+1, D)  shared positional embedding (resident)
    # o_ref   : (1, Np+1, D)
    pos = pos_ref[0]                                   # (Np+1, D) single VMEM load
    o_ref[0, :1, :] = cls_ref[0] + pos[:1, :]          # row 0: cls + pos[0]
    o_ref[0, 1:, :] = x_ref[0] + pos[1:, :]            # rows 1..: x + pos[1:]


def embedding_forward(x, cls_token, pos_embedding):
    B, Np, D = x.shape
    N = Np + 1
    return pl.pallas_call(
        _embedding_kernel,
        out_shape=jax.ShapeDtypeStruct((B, N, D), x.dtype),
        grid=(B,),
        in_specs=[
            pl.BlockSpec((1, Np, D), lambda b: (b, 0, 0)),   # per-batch x slab
            pl.BlockSpec((1, 1, D), lambda b: (0, 0, 0)),    # cls token (shared)
            pl.BlockSpec((1, N, D), lambda b: (0, 0, 0)),    # pos emb   (shared)
        ],
        out_specs=pl.BlockSpec((1, N, D), lambda b: (b, 0, 0)),
        compiler_params=pltpu.CompilerParams(
            dimension_semantics=("parallel",)),              # megacore on v7x
    )(x, cls_token, pos_embedding)


# ----------------------------- parameter construction -----------------------------

def sincos_posemb(len_li, patch_dim, temperature=10000.0):
    # Mirrors Embedding.posemb(): pe[0, i, 0::2] = sin(i*div), pe[0, i, 1::2] = cos(i*div)
    assert patch_dim % 2 == 0, "feature dimension must be multiple of 2 for sincos emb"
    pe = np.zeros((1, len_li, patch_dim), np.float32)
    div_term = np.exp(
        np.arange(0, patch_dim, 2, dtype=np.float32) * (-math.log(temperature) / patch_dim))
    pos = np.arange(len_li, dtype=np.float32)[:, None]
    pe[0, :, 0::2] = np.sin(pos * div_term)
    pe[0, :, 1::2] = np.cos(pos * div_term)
    return jnp.asarray(pe)


# ----------------------------- main -----------------------------

if __name__ == "__main__":
    # Small shapes consistent with the module: x = (batch, n_patches, dim).
    # dim = 128 keeps the output lane-dense (full 128-lane stores).
    B, n_patches, dim = 2, 16, 128

    key = jax.random.PRNGKey(0)
    kx, kc = jax.random.split(key)
    x = jax.random.normal(kx, (B, n_patches, dim), jnp.float32)
    cls_token = jax.random.normal(kc, (1, 1, dim), jnp.float32)   # nn.Parameter(randn(1,1,dim))
    pos_embedding = sincos_posemb(n_patches + 1, dim)             # built at __init__ time

    out = embedding_forward(x, cls_token, pos_embedding)
    jax.block_until_ready(out)

    # Pure-JAX reference: cat([cls_tokens, x], dim=1) + pos_embedding
    ref = jnp.concatenate([jnp.tile(cls_token, (B, 1, 1)), x], axis=1) + pos_embedding
    assert out.shape == (B, n_patches + 1, dim)
    assert jnp.allclose(out, ref, atol=1e-6), float(jnp.max(jnp.abs(out - ref)))
    print("KERNEL_OK")
</pallas_src>

<mosaic_0001>
module attributes {stable_mosaic.version = 11 : i64} {
  func.func @_embedding_kernel(%arg0: i32, %arg1: memref<1x16x128xf32, #tpu.memory_space<vmem>>, %arg2: memref<1x1x128xf32, #tpu.memory_space<vmem>>, %arg3: memref<1x17x128xf32, #tpu.memory_space<vmem>>, %arg4: memref<1x17x128xf32, #tpu.memory_space<vmem>>) attributes {dimension_semantics = [#tpu.dimension_semantics<parallel>], iteration_bounds = array<i64: 2>, scalar_prefetch = 0 : i64, scratch_operands = 0 : i64, tpu.core_type = #tpu.core_type<tc>, window_params = [{transform_indices = @transform_0, window_bounds = array<i64: 1, 16, 128>}, {pipeline_mode = #tpu.pipeline_mode<synchronous>, transform_indices = @transform_1, window_bounds = array<i64: 1, 1, 128>}, {pipeline_mode = #tpu.pipeline_mode<synchronous>, transform_indices = @transform_2, window_bounds = array<i64: 1, 17, 128>}, {transform_indices = @transform_3, window_bounds = array<i64: 1, 17, 128>}]} {
    %c0 = arith.constant 0 : index
    %c0_0 = arith.constant 0 : index
    %c0_1 = arith.constant 0 : index
    %0 = vector.load %arg3[%c0, %c0_0, %c0_1] : memref<1x17x128xf32, #tpu.memory_space<vmem>>, vector<1x17x128xf32>
    %1 = vector.shape_cast %0 : vector<1x17x128xf32> to vector<17x128xf32>
    %c0_2 = arith.constant 0 : index
    %c0_3 = arith.constant 0 : index
    %c0_4 = arith.constant 0 : index
    %2 = vector.load %arg2[%c0_2, %c0_3, %c0_4] : memref<1x1x128xf32, #tpu.memory_space<vmem>>, vector<1x1x128xf32>
    %3 = vector.shape_cast %2 : vector<1x1x128xf32> to vector<1x128xf32>
    %4 = vector.extract_strided_slice %1 {offsets = [0, 0], sizes = [1, 128], strides = [1, 1]} : vector<17x128xf32> to vector<1x128xf32>
    %5 = arith.addf %3, %4 : vector<1x128xf32>
    %c0_5 = arith.constant 0 : index
    %c0_6 = arith.constant 0 : index
    %c0_7 = arith.constant 0 : index
    %6 = vector.load %arg4[%c0_5, %c0_6, %c0_7] : memref<1x17x128xf32, #tpu.memory_space<vmem>>, vector<1x1x128xf32>
    %7 = vector.shape_cast %6 : vector<1x1x128xf32> to vector<1x128xf32>
    %8 = vector.shape_cast %5 : vector<1x128xf32> to vector<1x1x128xf32>
    tpu.vector_store %arg4[%c0_5, %c0_6, %c0_7], %8 {strides = array<i32>} : memref<1x17x128xf32, #tpu.memory_space<vmem>>, vector<1x1x128xf32>,
    %c0_8 = arith.constant 0 : index
    %c0_9 = arith.constant 0 : index
    %c0_10 = arith.constant 0 : index
    %9 = vector.load %arg1[%c0_8, %c0_9, %c0_10] : memref<1x16x128xf32, #tpu.memory_space<vmem>>, vector<1x16x128xf32>
    %10 = vector.shape_cast %9 : vector<1x16x128xf32> to vector<16x128xf32>
    %11 = vector.extract_strided_slice %1 {offsets = [1, 0], sizes = [16, 128], strides = [1, 1]} : vector<17x128xf32> to vector<16x128xf32>
    %12 = arith.addf %10, %11 : vector<16x128xf32>
    %c0_11 = arith.constant 0 : index
    %c1 = arith.constant 1 : index
    %c0_12 = arith.constant 0 : index
    %13 = vector.load %arg4[%c0_11, %c1, %c0_12] : memref<1x17x128xf32, #tpu.memory_space<vmem>>, vector<1x16x128xf32>
    %14 = vector.shape_cast %13 : vector<1x16x128xf32> to vector<16x128xf32>
    %15 = vector.shape_cast %12 : vector<16x128xf32> to vector<1x16x128xf32>
    tpu.vector_store %arg4[%c0_11, %c1, %c0_12], %15 {strides = array<i32>} : memref<1x17x128xf32, #tpu.memory_space<vmem>>, vector<1x16x128xf32>,
    return
  }
  func.func @transform_0(%arg0: i32) -> (i32, i32, i32) {
    %c0_i32 = arith.constant 0 : i32
    %c0_i32_0 = arith.constant 0 : i32
    %c0_i32_1 = arith.constant 0 : i32
    return %arg0, %c0_i32, %c0_i32_0 : i32, i32, i32
  }
  func.func @transform_1(%arg0: i32) -> (i32, i32, i32) {
    %c0_i32 = arith.constant 0 : i32
    %c0_i32_0 = arith.constant 0 : i32
    %c0_i32_1 = arith.constant 0 : i32
    %c0_i32_2 = arith.constant 0 : i32
    return %c0_i32, %c0_i32_0, %c0_i32_1 : i32, i32, i32
  }
  func.func @transform_2(%arg0: i32) -> (i32, i32, i32) {
    %c0_i32 = arith.constant 0 : i32
    %c0_i32_0 = arith.constant 0 : i32
    %c0_i32_1 = arith.constant 0 : i32
    %c0_i32_2 = arith.constant 0 : i32
    return %c0_i32, %c0_i32_0, %c0_i32_1 : i32, i32, i32
  }
  func.func @transform_3(%arg0: i32) -> (i32, i32, i32) {
    %c0_i32 = arith.constant 0 : i32
    %c0_i32_0 = arith.constant 0 : i32
    %c0_i32_1 = arith.constant 0 : i32
    return %arg0, %c0_i32, %c0_i32_0 : i32, i32, i32
  }
}

</mosaic_0001>

<llo_original>
// kernel: tpu_custom_call.1
$region0: #{tpu_custom_call.1}
  #allocation0 [shape = 'u32[]', space=smem, size = 0x4, offset = 0x4, fixed_abs, tag = 'smem constant byte address 0x4 - core index']
  #allocation1 [shape = 'u32[144,128]{1,0:T(1,128)}', space=vmem, size = 0x12000, scoped, tag = 'internal scratch']
  %s0 = inlined_call_operand.vmem [shape: f32[2,16,128], index: 0, kind: input, shape index: {}]
  %s1 = inlined_call_operand.vmem [shape: f32[1,1,128], index: 1, kind: input, shape index: {}]
  %s2 = inlined_call_operand.vmem [shape: f32[1,17,128], index: 2, kind: input, shape index: {}]
  %s3 = inlined_call_operand.vmem [shape: f32[2,17,128], index: 3, kind: output, shape index: {}]
  %s4 = sld [smem:[#allocation0]]
  $region45: #{tpu_custom_call.1} parent=0
    _
  %s6 = ssub.s32 1, %s4
  %s7 = scalar_select 0, %s6, %s4
  loop: start=0, step=1, limit=4
  $region2: #{tpu_custom_call.1} parent=0 // loop_pre_header
    _
  $region3: #{tpu_custom_call.1} parent=0 // loop_header
    %s9 = sphi 0, %s13
    %p10 = scmp.ge.s32.totalorder %s9, 4
    %s19 = sphi 0, %s21
    %s22 = sphi 0, %s19
    %s23 = sphi 0, %s22
    %s39 = sphi 0, %s23
    %s43 = sphi 0, %s43
    %s45 = sphi 0, %s43
    %s46 = sphi 0, %s45
    %s60 = sphi 0, %s46
    %s64 = sphi 0, %s64
    %s66 = sphi 0, %s64
    %s67 = sphi 0, %s66
    %s81 = sphi 0, %s67
    %s87 = sphi 0, %s89
    %s90 = sphi 0, %s87
    %s91 = sphi 0, %s90
    %s107 = sphi 0, %s91
  $region4: #{tpu_custom_call.1} parent=0 // loop_header_branch
    %12 = sbr.rel (%p10) target = $region8
  $region5: #{tpu_custom_call.1} parent=0 // loop_body
    %s14 = ssub.s32 %s9, 1
    %s15 = ssub.s32 %s9, 2
    %s16 = sadd.s32 %s9, 1
    %s17 = ssub.s32 %s9, %s16
    %p18 = scmp.eq.s32.totalorder %s17, 0
    %s20 = sadd.s32 %s19, 1
    %s21 = scalar_select %p18, %s19, %s20
    %p24 = pneg %p18
    %p25 = scmp.eq.s32.totalorder %s9, 1
    %p26 = por %p24, %p25
    %p27 = scmp.ne.s32.totalorder %s19, %s22
    %p28 = scmp.eq.s32.totalorder %s9, 0
    %p29 = por %p27, %p28
    %p30 = scmp.ne.s32.totalorder %s19, %s22
    %p31 = scmp.eq.s32.totalorder %s14, 1
    %p32 = por %p30, %p31
    %p33 = scmp.ne.s32.totalorder %s22, %s23
    %p34 = scmp.eq.s32.totalorder %s14, 0
    %p35 = por %p33, %p34
    %p36 = scmp.ne.s32.totalorder %s22, %s23
    %p37 = scmp.eq.s32.totalorder %s15, 1
    %p38 = por %p36, %p37
    %p40 = scmp.ne.s32.totalorder %s23, %s39
    %p41 = scmp.eq.s32.totalorder %s15, 0
    %p42 = por %p40, %p41
    %s44 = sadd.s32 %s43, 1
    %p47 = scmp.eq.s32.totalorder %s9, 1
    %p48 = scmp.ne.s32.totalorder %s43, %s45
    %p49 = scmp.eq.s32.totalorder %s9, 0
    %p50 = por %p48, %p49
    %p51 = scmp.ne.s32.totalorder %s43, %s45
    %p52 = scmp.eq.s32.totalorder %s14, 1
    %p53 = por %p51, %p52
    %p54 = scmp.ne.s32.totalorder %s45, %s46
    %p55 = scmp.eq.s32.totalorder %s14, 0
    %p56 = por %p54, %p55
    %p57 = scmp.ne.s32.totalorder %s45, %s46
    %p58 = scmp.eq.s32.totalorder %s15, 1
    %p59 = por %p57, %p58
    %p61 = scmp.ne.s32.totalorder %s46, %s60
    %p62 = scmp.eq.s32.totalorder %s15, 0
    %p63 = por %p61, %p62
    %s65 = sadd.s32 %s64, 1
    %p68 = scmp.eq.s32.totalorder %s9, 1
    %p69 = scmp.ne.s32.totalorder %s64, %s66
    %p70 = scmp.eq.s32.totalorder %s9, 0
    %p71 = por %p69, %p70
    %p72 = scmp.ne.s32.totalorder %s64, %s66
    %p73 = scmp.eq.s32.totalorder %s14, 1
    %p74 = por %p72, %p73
    %p75 = scmp.ne.s32.totalorder %s66, %s67
    %p76 = scmp.eq.s32.totalorder %s14, 0
    %p77 = por %p75, %p76
    %p78 = scmp.ne.s32.totalorder %s66, %s67
    %p79 = scmp.eq.s32.totalorder %s15, 1
    %p80 = por %p78, %p79
    %p82 = scmp.ne.s32.totalorder %s67, %s81
    %p83 = scmp.eq.s32.totalorder %s15, 0
    %p84 = por %p82, %p83
    %s85 = ssub.s32 %s9, %s16
    %p86 = scmp.eq.s32.totalorder %s85, 0
    %s88 = sadd.s32 %s87, 1
    %s89 = scalar_select %p86, %s87, %s88
    %p92 = pneg %p86
    %p93 = scmp.eq.s32.totalorder %s9, 1
    %p94 = por %p92, %p93
    %p95 = scmp.ne.s32.totalorder %s87, %s90
    %p96 = scmp.eq.s32.totalorder %s9, 0
    %p97 = por %p95, %p96
    %p98 = scmp.ne.s32.totalorder %s87, %s90
    %p99 = scmp.eq.s32.totalorder %s14, 1
    %p100 = por %p98, %p99
    %p101 = scmp.ne.s32.totalorder %s90, %s91
    %p102 = scmp.eq.s32.totalorder %s14, 0
    %p103 = por %p101, %p102
    %p104 = scmp.ne.s32.totalorder %s90, %s91
    %p105 = scmp.eq.s32.totalorder %s15, 1
    %p106 = por %p104, %p105
    %p108 = scmp.ne.s32.totalorder %s91, %s107
    %p109 = scmp.eq.s32.totalorder %s15, 0
    %p110 = por %p108, %p109
    %p111 = scmp.le.s32.totalorder 1, %s9
    %p112 = scmp.lt.s32.totalorder %s9, 3
    %p113 = pnand %p111, %p112
    %p114 = pneg %p113
    // Predicated region
    $region9: #{tpu_custom_call.1} parent=5 // pred_check
      _
    $region10: #{tpu_custom_call.1} parent=5 // pred_check_branch
      %116 = sbr.rel (%p113) target = $region12
    $region11: #{tpu_custom_call.1} parent=5 // pred_region
      %s117 = ssub.s32 %s9, 1
      // Predicated region
      $region13: #{tpu_custom_call.1} parent=11 // pred_check
        %p118 = pneg %p56
      $region14: #{tpu_custom_call.1} parent=11 // pred_check_branch
        %120 = sbr.rel (%p118) target = $region16
      $region15: #{tpu_custom_call.1} parent=11 // pred_region
        _
      $region16: #{tpu_custom_call.1} parent=11 // pred_fallthru
        _
      // Predicated region
      $region17: #{tpu_custom_call.1} parent=11 // pred_check
        %p121 = pneg %p77
      $region18: #{tpu_custom_call.1} parent=11 // pred_check_branch
        %123 = sbr.rel (%p121) target = $region20
      $region19: #{tpu_custom_call.1} parent=11 // pred_region
        _
      $region20: #{tpu_custom_call.1} parent=11 // pred_fallthru
        _
    $region12: #{tpu_custom_call.1} parent=5 // pred_fallthru
      _
    %p124 = scmp.lt.s32.totalorder %s9, 2
    // Predicated region
    $region21: #{tpu_custom_call.1} parent=5 // pred_check
      %p125 = pneg %p124
    $region22: #{tpu_custom_call.1} parent=5 // pred_check_branch
      %127 = sbr.rel (%p125) target = $region24
    $region23: #{tpu_custom_call.1} parent=5 // pred_region
      // Predicated region
      $region25: #{tpu_custom_call.1} parent=23 // pred_check
        %p128 = pneg %p29
      $region26: #{tpu_custom_call.1} parent=23 // pred_check_branch
        %130 = sbr.rel (%p128) target = $region28
      $region27: #{tpu_custom_call.1} parent=23 // pred_region
        %p131 = scmp.lt.s32.totalorder %s9, 1
        %s132 = scalar_select %p131, %s9, 1
        %s133 = smul.addr %s132, 2
        %s134 = smul.addr %s133, 8
        %s135 = scalar_lea.vmem %s0, %s134
      $region28: #{tpu_custom_call.1} parent=23 // pred_fallthru
        _
    $region24: #{tpu_custom_call.1} parent=5 // pred_fallthru
      _
    %p136 = scmp.le.s32.totalorder 1, %s9
    %p137 = scmp.lt.s32.totalorder %s9, 3
    %p138 = pnand %p136, %p137
    %p139 = pneg %p138
    // Predicated region
    $region29: #{tpu_custom_call.1} parent=5 // pred_check
      _
    $region30: #{tpu_custom_call.1} parent=5 // pred_check_branch
      %141 = sbr.rel (%p138) target = $region32
    $region31: #{tpu_custom_call.1} parent=5 // pred_region
      %s142 = ssub.s32 %s9, 1
      %p143 = scmp.lt.s32.totalorder %s14, 1
      %s144 = scalar_select %p143, %s14, 1
      %s145 = smul.addr %s144, 2
      %s146 = smul.addr %s145, 8
      %s147 = scalar_lea.vmem %s0, %s146
      %p148 = pneg %p35
      %p149 = pneg %p32
      %p150 = pneg %p56
      %p151 = pneg %p53
      %p152 = pneg %p77
      %p153 = pneg %p74
      %p154 = pneg %p103
      %p155 = pneg %p100
      %p156 = scmp.lt.s32.totalorder %s14, 1
      %s157 = scalar_select %p156, %s14, 1
      %s158 = smul.addr %s157, 3
      %s159 = smul.addr %s158, 8
      %s160 = scalar_lea.vmem %s3, %s159
      %p161 = scmp.lt.s32.totalorder %s14, 1
      %s162 = scalar_select %p161, %s14, 1
      %s163 = smul.addr %s162, 2
      %s164 = smul.addr %s163, 8
      %s165 = scalar_lea.vmem %s0, %s164
      %p166 = scmp.lt.s32.totalorder %s14, 1
      %s167 = scalar_select %p166, %s14, 1
      %s168 = smul.addr %s167, 3
      %s169 = smul.addr %s168, 8
      %s170 = scalar_lea.vmem %s3, %s169
      %v171 = vld [vmem:[%s2] sm:$0xff]
      %v172 = vld [vmem:[%s2 + $0x8] sm:$0xff]
      %v173 = vld [vmem:[%s2 + $0x10] sm:$0x1]
      %v174 = vld [vmem:[%s1] sm:$0x1]
      %v175 = vadd.f32 %v174, %v171
      %176 = vst [vmem:[%s170] sm:$0x1] %v175
      %v177 = vld [vmem:[%s165] sm:$0xff]
      %v178 = vld [vmem:[%s165 + $0x8] sm:$0xff]
      %vm182 = vcmask 1046528
      %v183 = vrot.slane %v171, 1
      %v184 = vrot.slane %v172, 1
      %v185 = vsel %vm182, %v183, %v184
      %v186 = vrot.slane %v173, 1
      %v187 = vsel %vm182, %v184, %v186
      %v190 = vadd.f32 %v177, %v185
      %v191 = vadd.f32 %v178, %v187
      %192 = vst [vmem:[%s170 + $0x1] sm:$0xff] %v190
      %193 = vst [vmem:[%s170 + $0x9] sm:$0xff] %v191
      %p194 = scmp.lt.s32.totalorder %s14, 1
      %s195 = scalar_select %p194, %s14, 1
      %s196 = smul.addr %s195, 3
      %s197 = smul.addr %s196, 8
      %s198 = scalar_lea.vmem %s3, %s197
      // Predicated region
      $region33: #{tpu_custom_call.1} parent=31 // pred_check
        %p199 = pneg %p100
      $region34: #{tpu_custom_call.1} parent=31 // pred_check_branch
        %201 = sbr.rel (%p199) target = $region36
      $region35: #{tpu_custom_call.1} parent=31 // pred_region
        _
      $region36: #{tpu_custom_call.1} parent=31 // pred_fallthru
        _
    $region32: #{tpu_custom_call.1} parent=5 // pred_fallthru
      _
    %p202 = scmp.le.s32.totalorder 2, %s9
    // Predicated region
    $region37: #{tpu_custom_call.1} parent=5 // pred_check
      %p203 = pneg %p202
    $region38: #{tpu_custom_call.1} parent=5 // pred_check_branch
      %205 = sbr.rel (%p203) target = $region40
    $region39: #{tpu_custom_call.1} parent=5 // pred_region
      %s206 = ssub.s32 %s9, 2
      // Predicated region
      $region41: #{tpu_custom_call.1} parent=39 // pred_check
        %p207 = pneg %p106
      $region42: #{tpu_custom_call.1} parent=39 // pred_check_branch
        %209 = sbr.rel (%p207) target = $region44
      $region43: #{tpu_custom_call.1} parent=39 // pred_region
        %p210 = scmp.lt.s32.totalorder %s15, 1
        %s211 = scalar_select %p210, %s15, 1
        %s212 = smul.addr %s211, 3
        %s213 = smul.addr %s212, 8
        %s214 = scalar_lea.vmem %s3, %s213
      $region44: #{tpu_custom_call.1} parent=39 // pred_fallthru
        _
    $region40: #{tpu_custom_call.1} parent=5 // pred_fallthru
      _
  $region6: #{tpu_custom_call.1} parent=0 // loop_footer
    %s13 = sadd.s32 1, %s9
  $region7: #{tpu_custom_call.1} parent=0 // loop_footer_branch
    %8 = sbr.rel target = $region3
  $region8: #{tpu_custom_call.1} parent=0 // loop_exit
    _

</llo_original>
